<compile_context>
chip_gen: v5e
topology: v5e:2x2
jax: 0.10.0
libtpu: 0.0.40
codegen_flags: <defaults>
</compile_context>

<pallas_src>
import math
import functools

import jax
import jax.numpy as jnp
from jax.experimental import pallas as pl
from jax.experimental.pallas import tpu as pltpu

# ---- static config (mirrors the PyTorch module's config) ----
HIDDEN = 32
NUM_HEADS = 4
HEAD_DIM = HIDDEN // NUM_HEADS
BATCH = 2
SEQ = 8
ALPHA = 0.1
ITER_NUM = 2
TEMPERATURE = 1.0
DIFFUSION_MODE = False
DROPOUT_P = 0.1  # eval mode -> identity

MASK_FILL = -10000.0   # masked_fill value from the original module
NEG_EDGE = -1e30       # additive offset that removes non-edges from the softmax max


def gn_self_attn_kernel(x_ref, w_ref, b_ref, offs_ref, out_ref,
                        *, num_heads, head_dim, alpha, iter_num,
                        temperature, diffusion_mode):
    """Single invocation over the whole batched block-diagonal graph (N = B*S nodes)."""
    H, d = num_heads, head_dim
    E = H * d

    x = x_ref[...]        # (N, E)   bf16
    w = w_ref[...]        # (E, 3E)  bf16; columns [Q | K | V], head-major, Q pre-scaled
    b = b_ref[...]        # (1, 3E)  f32,  Q part pre-scaled
    offs = offs_ref[...]  # (N, N)   f32: 0 (edge) / -10000 (masked edge) / -1e30 (non-edge)

    # Derive keep / adjacency from the offset matrix (two VPU compares, no extra inputs).
    keep = (offs > 0.5 * MASK_FILL).astype(jnp.float32)   # 1 on unmasked edges
    adj = (offs > 0.5 * NEG_EDGE).astype(jnp.float32)     # 1 on all edges

    # ---- QKV projection: one MXU push, f32 accumulation ----
    qkv = jnp.dot(x, w, preferred_element_type=jnp.float32) + b           # (N, 3E) f32
    q = qkv[:, 0:E]            # (N, E)   already scaled by 1/sqrt(d) via W
    k = qkv[:, E:2 * E]        # (N, E)
    v = qkv[:, 2 * E:3 * E]    # (N, E)

    out_parts = []
    for h in range(H):          # static Python loop, H = 4
        sl = slice(h * d, (h + 1) * d)
        qh = q[:, sl].astype(jnp.bfloat16)                                # (N, d)
        kh = k[:, sl].astype(jnp.bfloat16)                                # (N, d)
        vh = v[:, sl]                                                     # (N, d) f32

        # edge scores: s[i, j] = q_i . k_j  (dst i, src j == dgl u_dot_v)
        s = jnp.einsum('qd,kd->qk', qh, kh,
                       preferred_element_type=jnp.float32)                # (N, N) f32
        # masked_fill(-10000) on masked edges, -1e30 on non-edges, identity elsewhere.
        s = s * keep + offs

        # edge_softmax over incoming edges of each destination node.
        m = jnp.max(s, axis=-1, keepdims=True)
        p = jnp.exp(s - m) * adj                       # non-edges exactly zeroed
        denom = jnp.sum(p, axis=-1, keepdims=True)
        # denom >= 1 whenever the row has >= 1 edge (argmax edge contributes exp(0)=1),
        # so max(denom, 1) only touches zero-in-degree rows (all-zero numerator) and the
        # approx reciprocal never sees a tiny value -> no inf/NaN.
        attn = p * pl.reciprocal(jnp.maximum(denom, 1.0), approx=True)    # (N, N) f32
        attn_bf = attn.astype(jnp.bfloat16)

        # ---- propagation (per head, bf16 MXU operands, f32 accumulation) ----
        if diffusion_mode:
            hc = math.exp(-temperature) * vh
            gather = hc
            fact = 1.0
            for kk in range(1, iter_num):
                hc = jnp.einsum('qk,kd->qd', attn_bf, hc.astype(jnp.bfloat16),
                                preferred_element_type=jnp.float32)
                fact *= temperature / kk
                gather = gather + fact * hc
            out_parts.append(gather)
        else:
            hc = vh
            for _ in range(iter_num):
                hc = jnp.einsum('qk,kd->qd', attn_bf, hc.astype(jnp.bfloat16),
                                preferred_element_type=jnp.float32)
                hc = (1.0 - alpha) * hc + alpha * vh
            out_parts.append(hc)

    # single lane-dense (N, E) store (one concat, heads on lanes, head-major)
    out_ref[...] = jnp.concatenate(out_parts, axis=-1).astype(out_ref.dtype)


def prepare_qkv_params(w_t, b_qkv, num_heads, head_dim):
    """W^T (E, 3E) already has the module's column order [Q | K | V] with heads
    head-major inside each block; just fold the 1/sqrt(head_dim) query scale into the
    first E columns and cast the weight slab to bf16 for the MXU (bias stays f32)."""
    E = num_heads * head_dim
    scale = 1.0 / math.sqrt(head_dim)
    col_scale = jnp.concatenate(
        [jnp.full((E,), scale, jnp.float32), jnp.ones((2 * E,), jnp.float32)])
    w_slab = (w_t * col_scale[None, :]).astype(jnp.bfloat16)               # (E, 3E)
    b_slab = (b_qkv * col_scale).reshape(1, 3 * E).astype(jnp.float32)     # (1, 3E)
    return w_slab, b_slab


def prepare_graph_offsets(attention_mask, adj):
    """Block-diagonal (B*S, B*S) additive offset matrix over the batched graph:
    0 on unmasked edges, -10000 on masked edges (exact masked_fill semantics),
    -1e30 on non-edges (including every cross-batch pair)."""
    B, S = attention_mask.shape
    N = B * S
    node_mask = (attention_mask >= 0).astype(jnp.float32)                  # (B, S)
    pair = node_mask[:, :, None] * node_mask[:, None, :]                   # (B, S, S)
    adj_f = adj.astype(jnp.float32)
    offs_blk = jnp.where(adj_f > 0,
                         jnp.where(pair > 0, 0.0, MASK_FILL),
                         NEG_EDGE).astype(jnp.float32)                     # (B, S, S)
    offs = jnp.full((N, N), NEG_EDGE, jnp.float32)
    for b in range(B):  # trace-time loop, B = 2
        offs = offs.at[b * S:(b + 1) * S, b * S:(b + 1) * S].set(offs_blk[b])
    return offs


def gn_self_attn_forward(hidden_states, attention_mask, adj, w_slab, b_slab,
                         *, num_heads=NUM_HEADS, alpha=ALPHA, iter_num=ITER_NUM,
                         temperature=TEMPERATURE, diffusion_mode=DIFFUSION_MODE):
    B, S, E = hidden_states.shape
    head_dim = E // num_heads
    N = B * S

    # DGL batching order: node id = b*S + s  (matches the module's reshape(-1, H, d)).
    x2 = hidden_states.reshape(N, E).astype(jnp.bfloat16)
    offs = prepare_graph_offsets(attention_mask, adj)

    kernel = functools.partial(
        gn_self_attn_kernel, num_heads=num_heads, head_dim=head_dim,
        alpha=alpha, iter_num=iter_num, temperature=temperature,
        diffusion_mode=diffusion_mode)

    # Whole problem is a few KB -> single invocation, everything whole-block in VMEM.
    # (On v7x a grid=(B,) "parallel" split across the 2 TCs is possible but the
    #  per-TC launch/DMA overhead dominates at this size, so we keep it collapsed.)
    out = pl.pallas_call(
        kernel,
        out_shape=jax.ShapeDtypeStruct((N, E), jnp.float32),
        in_specs=[pl.BlockSpec(memory_space=pltpu.MemorySpace.VMEM)
                  for _ in range(4)],
        out_specs=pl.BlockSpec(memory_space=pltpu.MemorySpace.VMEM),
    )(x2, w_slab, b_slab, offs)

    return out.reshape(B, S, E)


def gn_self_attn_reference(hidden_states, attention_mask, adj, w_slab, b_slab,
                           *, num_heads=NUM_HEADS, alpha=ALPHA, iter_num=ITER_NUM,
                           temperature=TEMPERATURE, diffusion_mode=DIFFUSION_MODE):
    """Pure-JAX reference with identical math (same bf16 MXU casts, exact division)."""
    B, S, E = hidden_states.shape
    d = E // num_heads
    N = B * S
    x2 = hidden_states.reshape(N, E).astype(jnp.bfloat16)
    offs = prepare_graph_offsets(attention_mask, adj)
    keep = (offs > 0.5 * MASK_FILL).astype(jnp.float32)
    adj_f = (offs > 0.5 * NEG_EDGE).astype(jnp.float32)

    qkv = jnp.dot(x2, w_slab, preferred_element_type=jnp.float32) + b_slab
    q, k, v = qkv[:, 0:E], qkv[:, E:2 * E], qkv[:, 2 * E:3 * E]

    parts = []
    for h in range(num_heads):
        sl = slice(h * d, (h + 1) * d)
        qh, kh, vh = q[:, sl].astype(jnp.bfloat16), k[:, sl].astype(jnp.bfloat16), v[:, sl]
        s = jnp.einsum('qd,kd->qk', qh, kh, preferred_element_type=jnp.float32)
        s = s * keep + offs
        m = jnp.max(s, axis=-1, keepdims=True)
        p = jnp.exp(s - m) * adj_f
        denom = jnp.maximum(jnp.sum(p, axis=-1, keepdims=True), 1.0)
        attn = (p / denom).astype(jnp.bfloat16)

        if diffusion_mode:
            hc = math.exp(-temperature) * vh
            gather = hc
            fact = 1.0
            for kk in range(1, iter_num):
                hc = jnp.einsum('qk,kd->qd', attn, hc.astype(jnp.bfloat16),
                                preferred_element_type=jnp.float32)
                fact *= temperature / kk
                gather = gather + fact * hc
            parts.append(gather)
        else:
            hc = vh
            for _ in range(iter_num):
                hc = jnp.einsum('qk,kd->qd', attn, hc.astype(jnp.bfloat16),
                                preferred_element_type=jnp.float32)
                hc = (1.0 - alpha) * hc + alpha * vh
            parts.append(hc)

    return jnp.concatenate(parts, axis=-1).reshape(B, S, E)


if __name__ == "__main__":
    key = jax.random.PRNGKey(0)
    k_x, k_w, k_b = jax.random.split(key, 3)

    # Inputs.
    hidden_states = jax.random.normal(k_x, (BATCH, SEQ, HIDDEN), dtype=jnp.float32)
    # attention_mask >= 0 means "keep"; mask out the last position of each batch.
    attention_mask = jnp.zeros((BATCH, SEQ), dtype=jnp.float32).at[:, -1].set(-10000.0)

    # Per-batch graph: local window |i-j| <= 2 (self loops included). Also make one
    # node zero-in-degree (last node of batch 1) to exercise the DGL no-message path.
    idx = jnp.arange(SEQ)
    window = (jnp.abs(idx[:, None] - idx[None, :]) <= 2).astype(jnp.float32)
    adj = jnp.broadcast_to(window, (BATCH, SEQ, SEQ))
    adj = adj.at[1, SEQ - 1, :].set(0.0)

    # Deterministic Wqkv init (PyTorch nn.Linear default: U(-1/sqrt(E), 1/sqrt(E))).
    bound = 1.0 / math.sqrt(HIDDEN)
    w_qkv = jax.random.uniform(k_w, (3 * HIDDEN, HIDDEN), jnp.float32, -bound, bound)
    b_qkv = jax.random.uniform(k_b, (3 * HIDDEN,), jnp.float32, -bound, bound)
    w_t = w_qkv.T  # (E, 3E) so that qkv = x @ w_t + b

    # Query-scaled bf16 weight slab + f32 bias (shared by kernel and reference).
    w_slab, b_slab = prepare_qkv_params(w_t, b_qkv, NUM_HEADS, HEAD_DIM)

    out = gn_self_attn_forward(hidden_states, attention_mask, adj, w_slab, b_slab)
    out = jax.block_until_ready(out)

    ref = gn_self_attn_reference(hidden_states, attention_mask, adj, w_slab, b_slab)
    assert out.shape == (BATCH, SEQ, HIDDEN)
    assert bool(jnp.all(jnp.isfinite(out))), "non-finite values in kernel output"
    assert jnp.allclose(out, ref, rtol=1e-2, atol=1e-2), "mismatch vs JAX reference"

    print("KERNEL_OK")
</pallas_src>

<mosaic_0001>
module attributes {stable_mosaic.version = 11 : i64} {
  func.func @gn_self_attn_kernel(%arg0: memref<16x32xbf16, #tpu.memory_space<vmem>>, %arg1: memref<32x96xbf16, #tpu.memory_space<vmem>>, %arg2: memref<1x96xf32, #tpu.memory_space<vmem>>, %arg3: memref<16x16xf32, #tpu.memory_space<vmem>>, %arg4: memref<16x32xf32, #tpu.memory_space<vmem>>) attributes {dimension_semantics = [], scalar_prefetch = 0 : i64, scratch_operands = 0 : i64, tpu.core_type = #tpu.core_type<tc>} {
    %c0 = arith.constant 0 : index
    %c0_0 = arith.constant 0 : index
    %0 = vector.load %arg0[%c0, %c0_0] : memref<16x32xbf16, #tpu.memory_space<vmem>>, vector<16x32xbf16>
    %c0_1 = arith.constant 0 : index
    %c0_2 = arith.constant 0 : index
    %1 = vector.load %arg1[%c0_1, %c0_2] : memref<32x96xbf16, #tpu.memory_space<vmem>>, vector<32x96xbf16>
    %c0_3 = arith.constant 0 : index
    %c0_4 = arith.constant 0 : index
    %2 = vector.load %arg2[%c0_3, %c0_4] : memref<1x96xf32, #tpu.memory_space<vmem>>, vector<1x96xf32>
    %c0_5 = arith.constant 0 : index
    %c0_6 = arith.constant 0 : index
    %3 = vector.load %arg3[%c0_5, %c0_6] : memref<16x16xf32, #tpu.memory_space<vmem>>, vector<16x16xf32>
    %cst = arith.constant -5.000000e+03 : f32
    %4 = vector.broadcast %cst : f32 to vector<16x16xf32>
    %5 = arith.cmpf ogt, %3, %4 : vector<16x16xf32>
    %6 = arith.extui %5 : vector<16x16xi1> to vector<16x16xi32>
    %7 = arith.sitofp %6 : vector<16x16xi32> to vector<16x16xf32>
    %cst_7 = arith.constant -5.000000e+29 : f32
    %8 = vector.broadcast %cst_7 : f32 to vector<16x16xf32>
    %9 = arith.cmpf ogt, %3, %8 : vector<16x16xf32>
    %10 = arith.extui %9 : vector<16x16xi1> to vector<16x16xi32>
    %11 = arith.sitofp %10 : vector<16x16xi32> to vector<16x16xf32>
    %cst_8 = arith.constant dense<0.000000e+00> : vector<16x96xf32>
    %12 = tpu.matmul %0, %1, %cst_8 {dimension_numbers = #tpu.dot_dimension_numbers<[1], [0], [0], [1], [0, 0, 1, 1], [], []>} : vector<16x32xbf16>, vector<32x96xbf16>, vector<16x96xf32> -> vector<16x96xf32>
    %13 = vector.broadcast %2 : vector<1x96xf32> to vector<16x96xf32>
    %14 = arith.addf %12, %13 : vector<16x96xf32>
    %15 = vector.extract_strided_slice %14 {offsets = [0, 0], sizes = [16, 32], strides = [1, 1]} : vector<16x96xf32> to vector<16x32xf32>
    %16 = vector.extract_strided_slice %14 {offsets = [0, 32], sizes = [16, 32], strides = [1, 1]} : vector<16x96xf32> to vector<16x32xf32>
    %17 = vector.extract_strided_slice %14 {offsets = [0, 64], sizes = [16, 32], strides = [1, 1]} : vector<16x96xf32> to vector<16x32xf32>
    %18 = vector.extract_strided_slice %15 {offsets = [0, 0], sizes = [16, 8], strides = [1, 1]} : vector<16x32xf32> to vector<16x8xf32>
    %19 = arith.truncf %18 : vector<16x8xf32> to vector<16x8xbf16>
    %20 = vector.extract_strided_slice %16 {offsets = [0, 0], sizes = [16, 8], strides = [1, 1]} : vector<16x32xf32> to vector<16x8xf32>
    %21 = arith.truncf %20 : vector<16x8xf32> to vector<16x8xbf16>
    %22 = vector.extract_strided_slice %17 {offsets = [0, 0], sizes = [16, 8], strides = [1, 1]} : vector<16x32xf32> to vector<16x8xf32>
    "tpu.trace_start"() <{level = 10 : i32, message = "qd,kd->qk"}> : () -> ()
    %cst_9 = arith.constant dense<0.000000e+00> : vector<16x16xf32>
    %23 = tpu.matmul %19, %21, %cst_9 {dimension_numbers = #tpu.dot_dimension_numbers<[1], [1], [0], [0], [0, 0, 1, 0], [], []>} : vector<16x8xbf16>, vector<16x8xbf16>, vector<16x16xf32> -> vector<16x16xf32>
    "tpu.trace_stop"() : () -> ()
    %24 = arith.mulf %23, %7 : vector<16x16xf32>
    %25 = arith.addf %24, %3 : vector<16x16xf32>
    %cst_10 = arith.constant dense<0xFF800000> : vector<16xf32>
    %26 = vector.multi_reduction <maximumf>, %25, %cst_10 [1] : vector<16x16xf32> to vector<16xf32>
    %27 = vector.shape_cast %26 : vector<16xf32> to vector<16x1xf32>
    %28 = vector.broadcast %27 : vector<16x1xf32> to vector<16x16xf32>
    %29 = arith.subf %25, %28 : vector<16x16xf32>
    %30 = math.exp %29 : vector<16x16xf32>
    %31 = arith.mulf %30, %11 : vector<16x16xf32>
    %cst_11 = arith.constant dense<0.000000e+00> : vector<16xf32>
    %32 = vector.multi_reduction <add>, %31, %cst_11 [1] : vector<16x16xf32> to vector<16xf32>
    %33 = vector.shape_cast %32 : vector<16xf32> to vector<16x1xf32>
    %cst_12 = arith.constant 1.000000e+00 : f32
    %34 = vector.broadcast %cst_12 : f32 to vector<16x1xf32>
    %35 = arith.maximumf %33, %34 : vector<16x1xf32>
    %36 = tpu.reciprocal %35 {approx = true} : vector<16x1xf32> -> vector<16x1xf32>
    %37 = vector.broadcast %36 : vector<16x1xf32> to vector<16x16xf32>
    %38 = arith.mulf %31, %37 : vector<16x16xf32>
    %39 = arith.truncf %38 : vector<16x16xf32> to vector<16x16xbf16>
    %40 = arith.truncf %22 : vector<16x8xf32> to vector<16x8xbf16>
    "tpu.trace_start"() <{level = 10 : i32, message = "qk,kd->qd"}> : () -> ()
    %cst_13 = arith.constant dense<0.000000e+00> : vector<16x8xf32>
    %41 = tpu.matmul %39, %40, %cst_13 {dimension_numbers = #tpu.dot_dimension_numbers<[1], [0], [0], [1], [0, 0, 1, 1], [], []>} : vector<16x16xbf16>, vector<16x8xbf16>, vector<16x8xf32> -> vector<16x8xf32>
    "tpu.trace_stop"() : () -> ()
    %cst_14 = arith.constant 0.899999976 : f32
    %42 = vector.broadcast %cst_14 : f32 to vector<16x8xf32>
    %43 = arith.mulf %42, %41 : vector<16x8xf32>
    %cst_15 = arith.constant 1.000000e-01 : f32
    %44 = vector.broadcast %cst_15 : f32 to vector<16x8xf32>
    %45 = arith.mulf %44, %22 : vector<16x8xf32>
    %46 = arith.addf %43, %45 : vector<16x8xf32>
    %47 = arith.truncf %46 : vector<16x8xf32> to vector<16x8xbf16>
    "tpu.trace_start"() <{level = 10 : i32, message = "qk,kd->qd"}> : () -> ()
    %cst_16 = arith.constant dense<0.000000e+00> : vector<16x8xf32>
    %48 = tpu.matmul %39, %47, %cst_16 {dimension_numbers = #tpu.dot_dimension_numbers<[1], [0], [0], [1], [0, 0, 1, 1], [], []>} : vector<16x16xbf16>, vector<16x8xbf16>, vector<16x8xf32> -> vector<16x8xf32>
    "tpu.trace_stop"() : () -> ()
    %cst_17 = arith.constant 0.899999976 : f32
    %49 = vector.broadcast %cst_17 : f32 to vector<16x8xf32>
    %50 = arith.mulf %49, %48 : vector<16x8xf32>
    %cst_18 = arith.constant 1.000000e-01 : f32
    %51 = vector.broadcast %cst_18 : f32 to vector<16x8xf32>
    %52 = arith.mulf %51, %22 : vector<16x8xf32>
    %53 = arith.addf %50, %52 : vector<16x8xf32>
    %54 = vector.extract_strided_slice %15 {offsets = [0, 8], sizes = [16, 8], strides = [1, 1]} : vector<16x32xf32> to vector<16x8xf32>
    %55 = arith.truncf %54 : vector<16x8xf32> to vector<16x8xbf16>
    %56 = vector.extract_strided_slice %16 {offsets = [0, 8], sizes = [16, 8], strides = [1, 1]} : vector<16x32xf32> to vector<16x8xf32>
    %57 = arith.truncf %56 : vector<16x8xf32> to vector<16x8xbf16>
    %58 = vector.extract_strided_slice %17 {offsets = [0, 8], sizes = [16, 8], strides = [1, 1]} : vector<16x32xf32> to vector<16x8xf32>
    "tpu.trace_start"() <{level = 10 : i32, message = "qd,kd->qk"}> : () -> ()
    %cst_19 = arith.constant dense<0.000000e+00> : vector<16x16xf32>
    %59 = tpu.matmul %55, %57, %cst_19 {dimension_numbers = #tpu.dot_dimension_numbers<[1], [1], [0], [0], [0, 0, 1, 0], [], []>} : vector<16x8xbf16>, vector<16x8xbf16>, vector<16x16xf32> -> vector<16x16xf32>
    "tpu.trace_stop"() : () -> ()
    %60 = arith.mulf %59, %7 : vector<16x16xf32>
    %61 = arith.addf %60, %3 : vector<16x16xf32>
    %cst_20 = arith.constant dense<0xFF800000> : vector<16xf32>
    %62 = vector.multi_reduction <maximumf>, %61, %cst_20 [1] : vector<16x16xf32> to vector<16xf32>
    %63 = vector.shape_cast %62 : vector<16xf32> to vector<16x1xf32>
    %64 = vector.broadcast %63 : vector<16x1xf32> to vector<16x16xf32>
    %65 = arith.subf %61, %64 : vector<16x16xf32>
    %66 = math.exp %65 : vector<16x16xf32>
    %67 = arith.mulf %66, %11 : vector<16x16xf32>
    %cst_21 = arith.constant dense<0.000000e+00> : vector<16xf32>
    %68 = vector.multi_reduction <add>, %67, %cst_21 [1] : vector<16x16xf32> to vector<16xf32>
    %69 = vector.shape_cast %68 : vector<16xf32> to vector<16x1xf32>
    %cst_22 = arith.constant 1.000000e+00 : f32
    %70 = vector.broadcast %cst_22 : f32 to vector<16x1xf32>
    %71 = arith.maximumf %69, %70 : vector<16x1xf32>
    %72 = tpu.reciprocal %71 {approx = true} : vector<16x1xf32> -> vector<16x1xf32>
    %73 = vector.broadcast %72 : vector<16x1xf32> to vector<16x16xf32>
    %74 = arith.mulf %67, %73 : vector<16x16xf32>
    %75 = arith.truncf %74 : vector<16x16xf32> to vector<16x16xbf16>
    %76 = arith.truncf %58 : vector<16x8xf32> to vector<16x8xbf16>
    "tpu.trace_start"() <{level = 10 : i32, message = "qk,kd->qd"}> : () -> ()
    %cst_23 = arith.constant dense<0.000000e+00> : vector<16x8xf32>
    %77 = tpu.matmul %75, %76, %cst_23 {dimension_numbers = #tpu.dot_dimension_numbers<[1], [0], [0], [1], [0, 0, 1, 1], [], []>} : vector<16x16xbf16>, vector<16x8xbf16>, vector<16x8xf32> -> vector<16x8xf32>
    "tpu.trace_stop"() : () -> ()
    %cst_24 = arith.constant 0.899999976 : f32
    %78 = vector.broadcast %cst_24 : f32 to vector<16x8xf32>
    %79 = arith.mulf %78, %77 : vector<16x8xf32>
    %cst_25 = arith.constant 1.000000e-01 : f32
    %80 = vector.broadcast %cst_25 : f32 to vector<16x8xf32>
    %81 = arith.mulf %80, %58 : vector<16x8xf32>
    %82 = arith.addf %79, %81 : vector<16x8xf32>
    %83 = arith.truncf %82 : vector<16x8xf32> to vector<16x8xbf16>
    "tpu.trace_start"() <{level = 10 : i32, message = "qk,kd->qd"}> : () -> ()
    %cst_26 = arith.constant dense<0.000000e+00> : vector<16x8xf32>
    %84 = tpu.matmul %75, %83, %cst_26 {dimension_numbers = #tpu.dot_dimension_numbers<[1], [0], [0], [1], [0, 0, 1, 1], [], []>} : vector<16x16xbf16>, vector<16x8xbf16>, vector<16x8xf32> -> vector<16x8xf32>
    "tpu.trace_stop"() : () -> ()
    %cst_27 = arith.constant 0.899999976 : f32
    %85 = vector.broadcast %cst_27 : f32 to vector<16x8xf32>
    %86 = arith.mulf %85, %84 : vector<16x8xf32>
    %cst_28 = arith.constant 1.000000e-01 : f32
    %87 = vector.broadcast %cst_28 : f32 to vector<16x8xf32>
    %88 = arith.mulf %87, %58 : vector<16x8xf32>
    %89 = arith.addf %86, %88 : vector<16x8xf32>
    %90 = vector.extract_strided_slice %15 {offsets = [0, 16], sizes = [16, 8], strides = [1, 1]} : vector<16x32xf32> to vector<16x8xf32>
    %91 = arith.truncf %90 : vector<16x8xf32> to vector<16x8xbf16>
    %92 = vector.extract_strided_slice %16 {offsets = [0, 16], sizes = [16, 8], strides = [1, 1]} : vector<16x32xf32> to vector<16x8xf32>
    %93 = arith.truncf %92 : vector<16x8xf32> to vector<16x8xbf16>
    %94 = vector.extract_strided_slice %17 {offsets = [0, 16], sizes = [16, 8], strides = [1, 1]} : vector<16x32xf32> to vector<16x8xf32>
    "tpu.trace_start"() <{level = 10 : i32, message = "qd,kd->qk"}> : () -> ()
    %cst_29 = arith.constant dense<0.000000e+00> : vector<16x16xf32>
    %95 = tpu.matmul %91, %93, %cst_29 {dimension_numbers = #tpu.dot_dimension_numbers<[1], [1], [0], [0], [0, 0, 1, 0], [], []>} : vector<16x8xbf16>, vector<16x8xbf16>, vector<16x16xf32> -> vector<16x16xf32>
    "tpu.trace_stop"() : () -> ()
    %96 = arith.mulf %95, %7 : vector<16x16xf32>
    %97 = arith.addf %96, %3 : vector<16x16xf32>
    %cst_30 = arith.constant dense<0xFF800000> : vector<16xf32>
    %98 = vector.multi_reduction <maximumf>, %97, %cst_30 [1] : vector<16x16xf32> to vector<16xf32>
    %99 = vector.shape_cast %98 : vector<16xf32> to vector<16x1xf32>
    %100 = vector.broadcast %99 : vector<16x1xf32> to vector<16x16xf32>
    %101 = arith.subf %97, %100 : vector<16x16xf32>
    %102 = math.exp %101 : vector<16x16xf32>
    %103 = arith.mulf %102, %11 : vector<16x16xf32>
    %cst_31 = arith.constant dense<0.000000e+00> : vector<16xf32>
    %104 = vector.multi_reduction <add>, %103, %cst_31 [1] : vector<16x16xf32> to vector<16xf32>
    %105 = vector.shape_cast %104 : vector<16xf32> to vector<16x1xf32>
    %cst_32 = arith.constant 1.000000e+00 : f32
    %106 = vector.broadcast %cst_32 : f32 to vector<16x1xf32>
    %107 = arith.maximumf %105, %106 : vector<16x1xf32>
    %108 = tpu.reciprocal %107 {approx = true} : vector<16x1xf32> -> vector<16x1xf32>
    %109 = vector.broadcast %108 : vector<16x1xf32> to vector<16x16xf32>
    %110 = arith.mulf %103, %109 : vector<16x16xf32>
    %111 = arith.truncf %110 : vector<16x16xf32> to vector<16x16xbf16>
    %112 = arith.truncf %94 : vector<16x8xf32> to vector<16x8xbf16>
    "tpu.trace_start"() <{level = 10 : i32, message = "qk,kd->qd"}> : () -> ()
    %cst_33 = arith.constant dense<0.000000e+00> : vector<16x8xf32>
    %113 = tpu.matmul %111, %112, %cst_33 {dimension_numbers = #tpu.dot_dimension_numbers<[1], [0], [0], [1], [0, 0, 1, 1], [], []>} : vector<16x16xbf16>, vector<16x8xbf16>, vector<16x8xf32> -> vector<16x8xf32>
    "tpu.trace_stop"() : () -> ()
    %cst_34 = arith.constant 0.899999976 : f32
    %114 = vector.broadcast %cst_34 : f32 to vector<16x8xf32>
    %115 = arith.mulf %114, %113 : vector<16x8xf32>
    %cst_35 = arith.constant 1.000000e-01 : f32
    %116 = vector.broadcast %cst_35 : f32 to vector<16x8xf32>
    %117 = arith.mulf %116, %94 : vector<16x8xf32>
    %118 = arith.addf %115, %117 : vector<16x8xf32>
    %119 = arith.truncf %118 : vector<16x8xf32> to vector<16x8xbf16>
    "tpu.trace_start"() <{level = 10 : i32, message = "qk,kd->qd"}> : () -> ()
    %cst_36 = arith.constant dense<0.000000e+00> : vector<16x8xf32>
    %120 = tpu.matmul %111, %119, %cst_36 {dimension_numbers = #tpu.dot_dimension_numbers<[1], [0], [0], [1], [0, 0, 1, 1], [], []>} : vector<16x16xbf16>, vector<16x8xbf16>, vector<16x8xf32> -> vector<16x8xf32>
    "tpu.trace_stop"() : () -> ()
    %cst_37 = arith.constant 0.899999976 : f32
    %121 = vector.broadcast %cst_37 : f32 to vector<16x8xf32>
    %122 = arith.mulf %121, %120 : vector<16x8xf32>
    %cst_38 = arith.constant 1.000000e-01 : f32
    %123 = vector.broadcast %cst_38 : f32 to vector<16x8xf32>
    %124 = arith.mulf %123, %94 : vector<16x8xf32>
    %125 = arith.addf %122, %124 : vector<16x8xf32>
    %126 = vector.extract_strided_slice %15 {offsets = [0, 24], sizes = [16, 8], strides = [1, 1]} : vector<16x32xf32> to vector<16x8xf32>
    %127 = arith.truncf %126 : vector<16x8xf32> to vector<16x8xbf16>
    %128 = vector.extract_strided_slice %16 {offsets = [0, 24], sizes = [16, 8], strides = [1, 1]} : vector<16x32xf32> to vector<16x8xf32>
    %129 = arith.truncf %128 : vector<16x8xf32> to vector<16x8xbf16>
    %130 = vector.extract_strided_slice %17 {offsets = [0, 24], sizes = [16, 8], strides = [1, 1]} : vector<16x32xf32> to vector<16x8xf32>
    "tpu.trace_start"() <{level = 10 : i32, message = "qd,kd->qk"}> : () -> ()
    %cst_39 = arith.constant dense<0.000000e+00> : vector<16x16xf32>
    %131 = tpu.matmul %127, %129, %cst_39 {dimension_numbers = #tpu.dot_dimension_numbers<[1], [1], [0], [0], [0, 0, 1, 0], [], []>} : vector<16x8xbf16>, vector<16x8xbf16>, vector<16x16xf32> -> vector<16x16xf32>
    "tpu.trace_stop"() : () -> ()
    %132 = arith.mulf %131, %7 : vector<16x16xf32>
    %133 = arith.addf %132, %3 : vector<16x16xf32>
    %cst_40 = arith.constant dense<0xFF800000> : vector<16xf32>
    %134 = vector.multi_reduction <maximumf>, %133, %cst_40 [1] : vector<16x16xf32> to vector<16xf32>
    %135 = vector.shape_cast %134 : vector<16xf32> to vector<16x1xf32>
    %136 = vector.broadcast %135 : vector<16x1xf32> to vector<16x16xf32>
    %137 = arith.subf %133, %136 : vector<16x16xf32>
    %138 = math.exp %137 : vector<16x16xf32>
    %139 = arith.mulf %138, %11 : vector<16x16xf32>
    %cst_41 = arith.constant dense<0.000000e+00> : vector<16xf32>
    %140 = vector.multi_reduction <add>, %139, %cst_41 [1] : vector<16x16xf32> to vector<16xf32>
    %141 = vector.shape_cast %140 : vector<16xf32> to vector<16x1xf32>
    %cst_42 = arith.constant 1.000000e+00 : f32
    %142 = vector.broadcast %cst_42 : f32 to vector<16x1xf32>
    %143 = arith.maximumf %141, %142 : vector<16x1xf32>
    %144 = tpu.reciprocal %143 {approx = true} : vector<16x1xf32> -> vector<16x1xf32>
    %145 = vector.broadcast %144 : vector<16x1xf32> to vector<16x16xf32>
    %146 = arith.mulf %139, %145 : vector<16x16xf32>
    %147 = arith.truncf %146 : vector<16x16xf32> to vector<16x16xbf16>
    %148 = arith.truncf %130 : vector<16x8xf32> to vector<16x8xbf16>
    "tpu.trace_start"() <{level = 10 : i32, message = "qk,kd->qd"}> : () -> ()
    %cst_43 = arith.constant dense<0.000000e+00> : vector<16x8xf32>
    %149 = tpu.matmul %147, %148, %cst_43 {dimension_numbers = #tpu.dot_dimension_numbers<[1], [0], [0], [1], [0, 0, 1, 1], [], []>} : vector<16x16xbf16>, vector<16x8xbf16>, vector<16x8xf32> -> vector<16x8xf32>
    "tpu.trace_stop"() : () -> ()
    %cst_44 = arith.constant 0.899999976 : f32
    %150 = vector.broadcast %cst_44 : f32 to vector<16x8xf32>
    %151 = arith.mulf %150, %149 : vector<16x8xf32>
    %cst_45 = arith.constant 1.000000e-01 : f32
    %152 = vector.broadcast %cst_45 : f32 to vector<16x8xf32>
    %153 = arith.mulf %152, %130 : vector<16x8xf32>
    %154 = arith.addf %151, %153 : vector<16x8xf32>
    %155 = arith.truncf %154 : vector<16x8xf32> to vector<16x8xbf16>
    "tpu.trace_start"() <{level = 10 : i32, message = "qk,kd->qd"}> : () -> ()
    %cst_46 = arith.constant dense<0.000000e+00> : vector<16x8xf32>
    %156 = tpu.matmul %147, %155, %cst_46 {dimension_numbers = #tpu.dot_dimension_numbers<[1], [0], [0], [1], [0, 0, 1, 1], [], []>} : vector<16x16xbf16>, vector<16x8xbf16>, vector<16x8xf32> -> vector<16x8xf32>
    "tpu.trace_stop"() : () -> ()
    %cst_47 = arith.constant 0.899999976 : f32
    %157 = vector.broadcast %cst_47 : f32 to vector<16x8xf32>
    %158 = arith.mulf %157, %156 : vector<16x8xf32>
    %cst_48 = arith.constant 1.000000e-01 : f32
    %159 = vector.broadcast %cst_48 : f32 to vector<16x8xf32>
    %160 = arith.mulf %159, %130 : vector<16x8xf32>
    %161 = arith.addf %158, %160 : vector<16x8xf32>
    %162 = tpu.concatenate %53, %89, %125, %161 in 1 : vector<16x8xf32>, vector<16x8xf32>, vector<16x8xf32>, vector<16x8xf32> -> vector<16x32xf32>
    %c0_49 = arith.constant 0 : index
    %c0_50 = arith.constant 0 : index
    %163 = vector.load %arg4[%c0_49, %c0_50] : memref<16x32xf32, #tpu.memory_space<vmem>>, vector<16x32xf32>
    tpu.vector_store %arg4[%c0_49, %c0_50], %162 {strides = array<i32>} : memref<16x32xf32, #tpu.memory_space<vmem>>, vector<16x32xf32>,
    return
  }
}

</mosaic_0001>

<llo_original>
// kernel: tpu_custom_call.1
$region0: #{tpu_custom_call.1}
  #allocation0 [shape = 'u32[]', space=smem, size = 0x4, offset = 0x4, fixed_abs, tag = 'smem constant byte address 0x4 - core index']
  #allocation1 [shape = 'u32[72,128]{1,0:T(1,128)}', space=vmem, size = 0x9000, scoped, tag = 'internal scratch']
  %s0 = inlined_call_operand.hbm [shape: bf16[16,32], index: 0, kind: input, shape index: {}]
  %s1 = inlined_call_operand.hbm [shape: bf16[32,96], index: 1, kind: input, shape index: {}]
  %s2 = inlined_call_operand.vmem [shape: f32[1,96], index: 2, kind: input, shape index: {}]
  %s3 = inlined_call_operand.hbm [shape: f32[16,16], index: 3, kind: input, shape index: {}]
  %s4 = inlined_call_operand.hbm [shape: f32[16,32], index: 4, kind: output, shape index: {}]
  %s5 = sld [smem:[#allocation0]]
  $region38: #{tpu_custom_call.1} parent=0
    _
  %s7 = ssub.s32 1, %s5
  %s8 = scalar_select 0, %s7, %s5
  $region1: #{tpu_custom_call.1} parent=0
    #allocation2 [shape = 'u8[4096]{0}', space=vmem, size = 0x1000, scoped, tag = 'input window, operand 0, single buffered']
    #allocation3 [shape = 's32[1]{0}', space=sflag, size = 0x4, scoped, tag = 'scoped memory for tpu_custom_call.1']
    #allocation4 [shape = 's32[1]{0}', space=sflag, size = 0x4, scoped, tag = 'scoped memory for tpu_custom_call.1']
    #allocation5 [shape = 'u8[8192]{0}', space=vmem, size = 0x2000, scoped, tag = 'input window, operand 1, single buffered']
    #allocation6 [shape = 's32[1]{0}', space=sflag, size = 0x4, scoped, tag = 'scoped memory for tpu_custom_call.1']
    #allocation7 [shape = 'u8[8192]{0}', space=vmem, size = 0x2000, scoped, tag = 'input window, operand 3, single buffered']
    #allocation8 [shape = 'u8[8192]{0}', space=vmem, size = 0x2000, scoped, tag = 'output window, operand 0, single buffered']
    %9 = vsyncpa [#allocation3], 0
    %10 = vsyncpa [#allocation6], 0
    %11 = vsyncpa [#allocation4], 0
    // Predicated region
    $region2: #{tpu_custom_call.1} parent=1 // pred_check
      _
    $region3: #{tpu_custom_call.1} parent=1 // pred_check_branch
      %13 = sbr.rel (0) target = $region5
    $region4: #{tpu_custom_call.1} parent=1 // pred_region
      %15 = vsyncadd [#allocation3], 0
      %s16 = sshll.u32 %s0, 4
      %s17 = int_to_ptr.hbm [resolvable:$true] %s16
      %s18 = sshll.u32 [#allocation2], 4
      %s19 = int_to_ptr.vmem [resolvable:$true] %s18
      %24 = dma.hbm_to_vmem [thread:$0]  %s17, 128, %s19, [#allocation3], 64, 64, 4
    $region5: #{tpu_custom_call.1} parent=1 // pred_fallthru
      _
    // Predicated region
    $region6: #{tpu_custom_call.1} parent=1 // pred_check
      _
    $region7: #{tpu_custom_call.1} parent=1 // pred_check_branch
      %26 = sbr.rel (0) target = $region9
    $region8: #{tpu_custom_call.1} parent=1 // pred_region
      %28 = vsyncadd [#allocation6], 0
      %s29 = sshll.u32 %s1, 4
      %s30 = int_to_ptr.hbm [resolvable:$true] %s29
      %s31 = sshll.u32 [#allocation5], 4
      %s32 = int_to_ptr.vmem [resolvable:$true] %s31
      %37 = dma.hbm_to_vmem [thread:$0]  %s30, 256, %s32, [#allocation6], 64, 64, 4
    $region9: #{tpu_custom_call.1} parent=1 // pred_fallthru
      _
    // Predicated region
    $region10: #{tpu_custom_call.1} parent=1 // pred_check
      _
    $region11: #{tpu_custom_call.1} parent=1 // pred_check_branch
      %39 = sbr.rel (0) target = $region13
    $region12: #{tpu_custom_call.1} parent=1 // pred_region
      _
    $region13: #{tpu_custom_call.1} parent=1 // pred_fallthru
      _
    // Predicated region
    $region14: #{tpu_custom_call.1} parent=1 // pred_check
      _
    $region15: #{tpu_custom_call.1} parent=1 // pred_check_branch
      %41 = sbr.rel (0) target = $region17
    $region16: #{tpu_custom_call.1} parent=1 // pred_region
      %43 = vsyncadd [#allocation6], 0
      %s44 = sshll.u32 %s3, 4
      %s45 = int_to_ptr.hbm [resolvable:$true] %s44
      %s46 = sshll.u32 [#allocation7], 4
      %s47 = int_to_ptr.vmem [resolvable:$true] %s46
      %52 = dma.hbm_to_vmem [thread:$0]  %s45, 256, %s47, [#allocation6], 128, 128, 8
    $region17: #{tpu_custom_call.1} parent=1 // pred_fallthru
      _
    // Predicated region
    $region18: #{tpu_custom_call.1} parent=1 // pred_check
      _
    $region19: #{tpu_custom_call.1} parent=1 // pred_check_branch
      %54 = sbr.rel (0) target = $region21
    $region20: #{tpu_custom_call.1} parent=1 // pred_region
      %56 = dma.done [#allocation3], 128
    $region21: #{tpu_custom_call.1} parent=1 // pred_fallthru
      _
    // Predicated region
    $region22: #{tpu_custom_call.1} parent=1 // pred_check
      _
    $region23: #{tpu_custom_call.1} parent=1 // pred_check_branch
      %58 = sbr.rel (0) target = $region25
    $region24: #{tpu_custom_call.1} parent=1 // pred_region
      %60 = dma.done [#allocation6], 256
    $region25: #{tpu_custom_call.1} parent=1 // pred_fallthru
      _
    // Predicated region
    $region26: #{tpu_custom_call.1} parent=1 // pred_check
      _
    $region27: #{tpu_custom_call.1} parent=1 // pred_check_branch
      %62 = sbr.rel (0) target = $region29
    $region28: #{tpu_custom_call.1} parent=1 // pred_region
      %64 = dma.done [#allocation6], 256
    $region29: #{tpu_custom_call.1} parent=1 // pred_fallthru
      _
    %v66 = vld [vmem:[#allocation2] sm:$0xf]
    %v67 = vld [vmem:[#allocation2 + $0x4] sm:$0xf]
    %v68 = vld [vmem:[#allocation5] sm:$0xf]
    %v69 = vld [vmem:[#allocation5 + $0x4] sm:$0xf]
    %v70 = vld [vmem:[#allocation5 + $0x8] sm:$0xf]
    %v71 = vld [vmem:[#allocation5 + $0xc] sm:$0xf]
    %v72 = vld [vmem:[%s2] sm:$0x1]
    %v73 = vld [vmem:[#allocation7] sm:$0xff]
    %v74 = vld [vmem:[#allocation7 + $0x8] sm:$0xff]
    %vm75 = vcmp.gt.f32.partialorder %v73, -5000.0
    %vm76 = vcmp.gt.f32.partialorder %v74, -5000.0
    %v77 = vsel %vm75, 1, 0
    %v78 = vsel %vm76, 1, 0
    %v79 = vcvt.s32.f32 %v77
    %v80 = vcvt.s32.f32 %v78
    %vm81 = vcmp.gt.f32.partialorder %v73, -5e+29
    %vm82 = vcmp.gt.f32.partialorder %v74, -5e+29
    %v83 = vsel %vm81, 1, 0
    %v84 = vsel %vm82, 1, 0
    %v85 = vcvt.s32.f32 %v83
    %v86 = vcvt.s32.f32 %v84
    %v88 = vperm.slane %v72, 0
    %v92 = vunpack.c.l.b16 %v66
    %v93 = vunpack.c.l.b16 %v67
    %v94 = vpack.c.b16 %v93, %v92
    %v99 = vunpack.c.l.b16 %v68
    %v100 = vunpack.c.l.b16 %v69
    %v101 = vunpack.c.l.b16 %v70
    %v102 = vunpack.c.l.b16 %v71
    %v103 = vpack.c.b16 %v100, %v99
    %v104 = vpack.c.b16 %v102, %v101
    %vm107 = vcmask 261120
    %v109 = vsel %vm107, %v94, 0
    %111 = vmatpush.bf16.msra.mxu0 0
    %112 = vmatpush.bf16.msra.mxu0 0
    %113 = vmatpush.bf16.msra.mxu0 0
    %114 = vmatpush.bf16.msra.mxu0 0
    %115 = vmatpush.bf16.msra.mxu0 0
    %116 = vmatpush.bf16.msra.mxu0 0
    %117 = vmatpush.bf16.msra.mxu0 %v104
    %118 = vmatpush.bf16.msra.mxu0 %v103
    %119 = vmatmul.bf16.gmra.mxu0 %v109
    %v120 = vpop.f32.mrf.mxu0
    %v121 = vadd.f32 %v88, %v120
    %v122 = vpop.f32.mrf.mxu0
    %v123 = vadd.f32 %v88, %v122
    %124 = vdwg.mxu0
    %v125 = vpack.c.bf16 %v123, %v121
    %127 = vrot.lane.b32.xlu0 %v125, 96
    %v128 = vpop.permute.xlu0 %127
    %vm129 = vcmask 64512
    %v131 = vsel %vm129, %v125, 0
    %v134 = vsel %vm129, %v128, 0
    %136 = vmatpush.bf16.xpose.msra.mxu0 0
    %137 = vmatpush.bf16.xpose.msra.mxu0 0
    %138 = vmatpush.bf16.xpose.msra.mxu0 0
    %139 = vmatpush.bf16.xpose.msra.mxu0 0
    %140 = vmatpush.bf16.xpose.msra.mxu0 0
    %141 = vmatpush.bf16.xpose.msra.mxu0 0
    %142 = vmatpush.bf16.xpose.msra.mxu0 0
    %143 = vmatpush.bf16.xpose.msra.mxu0 %v134
    %144 = vmatmul.bf16.gmra.mxu0 %v131
    %v145 = vpop.f32.mrf.mxu0
    %v146 = vadd.f32 0.0, %v145
    %v147 = vpop.f32.mrf.mxu0
    %v148 = vadd.f32 0.0, %v147
    %149 = vdwg.mxu0
    %v150 = vmul.f32 %v146, %v79
    %v151 = vmul.f32 %v148, %v80
    %v152 = vadd.f32 %v150, %v73
    %v153 = vadd.f32 %v151, %v74
    %vm154 = vcmask 130048
    %v155 = vsel %vm154, %v152, -inf
    %156 = vmax.xlane.f32.xlu0 %v155
    %v157 = vpop.xlane.xlu0 %156
    %v158 = vsel %vm154, %v153, -inf
    %159 = vmax.xlane.f32.xlu0 %v158
    %v160 = vpop.xlane.xlu0 %159
    %v161 = vsub.f32 %v152, %v157
    %v162 = vsub.f32 %v153, %v160
    %v163 = vmul.f32 %v161, 1.442695
    %v164 = vpow.pop %v163
    %v165 = vmul.f32 %v162, 1.442695
    %v166 = vpow.pop %v165
    %v167 = vmul.f32 %v164, %v85
    %v168 = vmul.f32 %v166, %v86
    %v169 = vsel %vm154, %v167, 0.0
    %170 = vadd.xlane.f32.xlu0 %v169
    %v171 = vpop.xlane.xlu0 %170
    %v172 = vsel %vm154, %v168, 0.0
    %173 = vadd.xlane.f32.xlu0 %v172
    %v174 = vpop.xlane.xlu0 %173
    %v175 = vmax.f32 %v171, 1.0
    %v176 = vmax.f32 %v174, 1.0
    %v177 = vrcp.pop %v175
    %v178 = vrcp.pop %v176
    %v179 = vmul.f32 %v167, %v177
    %v180 = vmul.f32 %v168, %v178
    %v181 = vpack.c.bf16 %v180, %v179
    %182 = vrot.lane.b32.xlu0 %v125, 64
    %v183 = vpop.permute.xlu0 %182
    %v186 = vsel %vm154, %v181, 0
    %188 = vmatpush.bf16.msra.mxu0 0
    %189 = vmatpush.bf16.msra.mxu0 0
    %190 = vmatpush.bf16.msra.mxu0 0
    %191 = vmatpush.bf16.msra.mxu0 0
    %192 = vmatpush.bf16.msra.mxu0 0
    %193 = vmatpush.bf16.msra.mxu0 0
    %194 = vmatpush.bf16.msra.mxu0 0
    %195 = vmatpush.bf16.msra.mxu0 %v183
    %196 = vmatmul.bf16.gmra.mxu0 %v186
    %v197 = vpop.f32.mrf.mxu0
    %v198 = vadd.f32 0.0, %v197
    %v199 = vpop.f32.mrf.mxu0
    %v200 = vadd.f32 0.0, %v199
    %201 = vdwg.mxu0
    %v202 = vmul.f32 %v198, 0.9
    %v203 = vmul.f32 %v200, 0.9
    %v204 = vmul.f32 %v121, 0.1
    %v205 = vmul.f32 %v123, 0.1
    %208 = vrot.lane.b32.xlu0 %v204, 64
    %v209 = vpop.permute.xlu0 %208
    %210 = vrot.lane.b32.xlu0 %v205, 64
    %v211 = vpop.permute.xlu0 %210
    %v214 = vadd.f32 %v202, %v209
    %v215 = vadd.f32 %v203, %v211
    %v216 = vpack.c.bf16 %v215, %v214
    %217 = vmatpush.bf16.msra.mxu0 0
    %218 = vmatpush.bf16.msra.mxu0 0
    %219 = vmatpush.bf16.msra.mxu0 0
    %220 = vmatpush.bf16.msra.mxu0 0
    %221 = vmatpush.bf16.msra.mxu0 0
    %222 = vmatpush.bf16.msra.mxu0 0
    %223 = vmatpush.bf16.msra.mxu0 0
    %224 = vmatpush.bf16.msra.mxu0 %v216
    %225 = vmatmul.bf16.gmra.mxu0 %v186
    %v226 = vpop.f32.mrf.mxu0
    %v227 = vadd.f32 0.0, %v226
    %v228 = vpop.f32.mrf.mxu0
    %v229 = vadd.f32 0.0, %v228
    %230 = vdwg.mxu0
    %v231 = vmul.f32 %v227, 0.9
    %v232 = vmul.f32 %v229, 0.9
    %v233 = vadd.f32 %v231, %v209
    %v234 = vadd.f32 %v232, %v211
    %235 = vrot.lane.b32.xlu0 %v125, 120
    %v236 = vpop.permute.xlu0 %235
    %237 = vrot.lane.b32.xlu0 %v125, 88
    %v238 = vpop.permute.xlu0 %237
    %v240 = vsel %vm129, %v236, 0
    %v243 = vsel %vm129, %v238, 0
    %245 = vmatpush.bf16.xpose.msra.mxu0 0
    %246 = vmatpush.bf16.xpose.msra.mxu0 0
    %247 = vmatpush.bf16.xpose.msra.mxu0 0
    %248 = vmatpush.bf16.xpose.msra.mxu0 0
    %249 = vmatpush.bf16.xpose.msra.mxu0 0
    %250 = vmatpush.bf16.xpose.msra.mxu0 0
    %251 = vmatpush.bf16.xpose.msra.mxu0 0
    %252 = vmatpush.bf16.xpose.msra.mxu0 %v243
    %253 = vmatmul.bf16.gmra.mxu0 %v240
    %v254 = vpop.f32.mrf.mxu0
    %v255 = vadd.f32 0.0, %v254
    %v256 = vpop.f32.mrf.mxu0
    %v257 = vadd.f32 0.0, %v256
    %258 = vdwg.mxu0
    %v259 = vmul.f32 %v255, %v79
    %v260 = vmul.f32 %v257, %v80
    %v261 = vadd.f32 %v259, %v73
    %v262 = vadd.f32 %v260, %v74
    %v263 = vsel %vm154, %v261, -inf
    %264 = vmax.xlane.f32.xlu0 %v263
    %v265 = vpop.xlane.xlu0 %264
    %v266 = vsel %vm154, %v262, -inf
    %267 = vmax.xlane.f32.xlu0 %v266
    %v268 = vpop.xlane.xlu0 %267
    %v269 = vsub.f32 %v261, %v265
    %v270 = vsub.f32 %v262, %v268
    %v271 = vmul.f32 %v269, 1.442695
    %v272 = vpow.pop %v271
    %v273 = vmul.f32 %v270, 1.442695
    %v274 = vpow.pop %v273
    %v275 = vmul.f32 %v272, %v85
    %v276 = vmul.f32 %v274, %v86
    %v277 = vsel %vm154, %v275, 0.0
    %278 = vadd.xlane.f32.xlu0 %v277
    %v279 = vpop.xlane.xlu0 %278
    %v280 = vsel %vm154, %v276, 0.0
    %281 = vadd.xlane.f32.xlu0 %v280
    %v282 = vpop.xlane.xlu0 %281
    %v283 = vmax.f32 %v279, 1.0
    %v284 = vmax.f32 %v282, 1.0
    %v285 = vrcp.pop %v283
    %v286 = vrcp.pop %v284
    %v287 = vmul.f32 %v275, %v285
    %v288 = vmul.f32 %v276, %v286
    %v289 = vpack.c.bf16 %v288, %v287
    %290 = vrot.lane.b32.xlu0 %v125, 56
    %v291 = vpop.permute.xlu0 %290
    %v294 = vsel %vm154, %v289, 0
    %296 = vmatpush.bf16.msra.mxu0 0
    %297 = vmatpush.bf16.msra.mxu0 0
    %298 = vmatpush.bf16.msra.mxu0 0
    %299 = vmatpush.bf16.msra.mxu0 0
    %300 = vmatpush.bf16.msra.mxu0 0
    %301 = vmatpush.bf16.msra.mxu0 0
    %302 = vmatpush.bf16.msra.mxu0 0
    %303 = vmatpush.bf16.msra.mxu0 %v291
    %304 = vmatmul.bf16.gmra.mxu0 %v294
    %v305 = vpop.f32.mrf.mxu0
    %v306 = vadd.f32 0.0, %v305
    %v307 = vpop.f32.mrf.mxu0
    %v308 = vadd.f32 0.0, %v307
    %309 = vdwg.mxu0
    %v310 = vmul.f32 %v306, 0.9
    %v311 = vmul.f32 %v308, 0.9
    %312 = vrot.lane.b32.xlu0 %v204, 56
    %v313 = vpop.permute.xlu0 %312
    %314 = vrot.lane.b32.xlu0 %v205, 56
    %v315 = vpop.permute.xlu0 %314
    %v318 = vadd.f32 %v310, %v313
    %v319 = vadd.f32 %v311, %v315
    %v320 = vpack.c.bf16 %v319, %v318
    %321 = vmatpush.bf16.msra.mxu0 0
    %322 = vmatpush.bf16.msra.mxu0 0
    %323 = vmatpush.bf16.msra.mxu0 0
    %324 = vmatpush.bf16.msra.mxu0 0
    %325 = vmatpush.bf16.msra.mxu0 0
    %326 = vmatpush.bf16.msra.mxu0 0
    %327 = vmatpush.bf16.msra.mxu0 0
    %328 = vmatpush.bf16.msra.mxu0 %v320
    %329 = vmatmul.bf16.gmra.mxu0 %v294
    %v330 = vpop.f32.mrf.mxu0
    %v331 = vadd.f32 0.0, %v330
    %v332 = vpop.f32.mrf.mxu0
    %v333 = vadd.f32 0.0, %v332
    %334 = vdwg.mxu0
    %v335 = vmul.f32 %v331, 0.9
    %v336 = vmul.f32 %v333, 0.9
    %v337 = vadd.f32 %v335, %v313
    %v338 = vadd.f32 %v336, %v315
    %339 = vrot.lane.b32.xlu0 %v125, 112
    %v340 = vpop.permute.xlu0 %339
    %341 = vrot.lane.b32.xlu0 %v125, 80
    %v342 = vpop.permute.xlu0 %341
    %v344 = vsel %vm129, %v340, 0
    %v347 = vsel %vm129, %v342, 0
    %349 = vmatpush.bf16.xpose.msra.mxu0 0
    %350 = vmatpush.bf16.xpose.msra.mxu0 0
    %351 = vmatpush.bf16.xpose.msra.mxu0 0
    %352 = vmatpush.bf16.xpose.msra.mxu0 0
    %353 = vmatpush.bf16.xpose.msra.mxu0 0
    %354 = vmatpush.bf16.xpose.msra.mxu0 0
    %355 = vmatpush.bf16.xpose.msra.mxu0 0
    %356 = vmatpush.bf16.xpose.msra.mxu0 %v347
    %357 = vmatmul.bf16.gmra.mxu0 %v344
    %v358 = vpop.f32.mrf.mxu0
    %v359 = vadd.f32 0.0, %v358
    %v360 = vpop.f32.mrf.mxu0
    %v361 = vadd.f32 0.0, %v360
    %362 = vdwg.mxu0
    %v363 = vmul.f32 %v359, %v79
    %v364 = vmul.f32 %v361, %v80
    %v365 = vadd.f32 %v363, %v73
    %v366 = vadd.f32 %v364, %v74
    %v367 = vsel %vm154, %v365, -inf
    %368 = vmax.xlane.f32.xlu0 %v367
    %v369 = vpop.xlane.xlu0 %368
    %v370 = vsel %vm154, %v366, -inf
    %371 = vmax.xlane.f32.xlu0 %v370
    %v372 = vpop.xlane.xlu0 %371
    %v373 = vsub.f32 %v365, %v369
    %v374 = vsub.f32 %v366, %v372
    %v375 = vmul.f32 %v373, 1.442695
    %v376 = vpow.pop %v375
    %v377 = vmul.f32 %v374, 1.442695
    %v378 = vpow.pop %v377
    %v379 = vmul.f32 %v376, %v85
    %v380 = vmul.f32 %v378, %v86
    %v381 = vsel %vm154, %v379, 0.0
    %382 = vadd.xlane.f32.xlu0 %v381
    %v383 = vpop.xlane.xlu0 %382
    %v384 = vsel %vm154, %v380, 0.0
    %385 = vadd.xlane.f32.xlu0 %v384
    %v386 = vpop.xlane.xlu0 %385
    %v387 = vmax.f32 %v383, 1.0
    %v388 = vmax.f32 %v386, 1.0
    %v389 = vrcp.pop %v387
    %v390 = vrcp.pop %v388
    %v391 = vmul.f32 %v379, %v389
    %v392 = vmul.f32 %v380, %v390
    %v393 = vpack.c.bf16 %v392, %v391
    %394 = vrot.lane.b32.xlu0 %v125, 48
    %v395 = vpop.permute.xlu0 %394
    %v398 = vsel %vm154, %v393, 0
    %400 = vmatpush.bf16.msra.mxu0 0
    %401 = vmatpush.bf16.msra.mxu0 0
    %402 = vmatpush.bf16.msra.mxu0 0
    %403 = vmatpush.bf16.msra.mxu0 0
    %404 = vmatpush.bf16.msra.mxu0 0
    %405 = vmatpush.bf16.msra.mxu0 0
    %406 = vmatpush.bf16.msra.mxu0 0
    %407 = vmatpush.bf16.msra.mxu0 %v395
    %408 = vmatmul.bf16.gmra.mxu0 %v398
    %v409 = vpop.f32.mrf.mxu0
    %v410 = vadd.f32 0.0, %v409
    %v411 = vpop.f32.mrf.mxu0
    %v412 = vadd.f32 0.0, %v411
    %413 = vdwg.mxu0
    %v414 = vmul.f32 %v410, 0.9
    %v415 = vmul.f32 %v412, 0.9
    %416 = vrot.lane.b32.xlu0 %v204, 48
    %v417 = vpop.permute.xlu0 %416
    %418 = vrot.lane.b32.xlu0 %v205, 48
    %v419 = vpop.permute.xlu0 %418
    %v422 = vadd.f32 %v414, %v417
    %v423 = vadd.f32 %v415, %v419
    %v424 = vpack.c.bf16 %v423, %v422
    %425 = vmatpush.bf16.msra.mxu0 0
    %426 = vmatpush.bf16.msra.mxu0 0
    %427 = vmatpush.bf16.msra.mxu0 0
    %428 = vmatpush.bf16.msra.mxu0 0
    %429 = vmatpush.bf16.msra.mxu0 0
    %430 = vmatpush.bf16.msra.mxu0 0
    %431 = vmatpush.bf16.msra.mxu0 0
    %432 = vmatpush.bf16.msra.mxu0 %v424
    %433 = vmatmul.bf16.gmra.mxu0 %v398
    %v434 = vpop.f32.mrf.mxu0
    %v435 = vadd.f32 0.0, %v434
    %v436 = vpop.f32.mrf.mxu0
    %v437 = vadd.f32 0.0, %v436
    %438 = vdwg.mxu0
    %v439 = vmul.f32 %v435, 0.9
    %v440 = vmul.f32 %v437, 0.9
    %v441 = vadd.f32 %v439, %v417
    %v442 = vadd.f32 %v440, %v419
    %443 = vrot.lane.b32.xlu0 %v125, 104
    %v444 = vpop.permute.xlu0 %443
    %445 = vrot.lane.b32.xlu0 %v125, 72
    %v446 = vpop.permute.xlu0 %445
    %v448 = vsel %vm129, %v444, 0
    %v451 = vsel %vm129, %v446, 0
    %453 = vmatpush.bf16.xpose.msra.mxu0 0
    %454 = vmatpush.bf16.xpose.msra.mxu0 0
    %455 = vmatpush.bf16.xpose.msra.mxu0 0
    %456 = vmatpush.bf16.xpose.msra.mxu0 0
    %457 = vmatpush.bf16.xpose.msra.mxu0 0
    %458 = vmatpush.bf16.xpose.msra.mxu0 0
    %459 = vmatpush.bf16.xpose.msra.mxu0 0
    %460 = vmatpush.bf16.xpose.msra.mxu0 %v451
    %461 = vmatmul.bf16.gmra.mxu0 %v448
    %v462 = vpop.f32.mrf.mxu0
    %v463 = vadd.f32 0.0, %v462
    %v464 = vpop.f32.mrf.mxu0
    %v465 = vadd.f32 0.0, %v464
    %466 = vdwg.mxu0
    %v467 = vmul.f32 %v463, %v79
    %v468 = vmul.f32 %v465, %v80
    %v469 = vadd.f32 %v467, %v73
    %v470 = vadd.f32 %v468, %v74
    %v471 = vsel %vm154, %v469, -inf
    %472 = vmax.xlane.f32.xlu0 %v471
    %v473 = vpop.xlane.xlu0 %472
    %v474 = vsel %vm154, %v470, -inf
    %475 = vmax.xlane.f32.xlu0 %v474
    %v476 = vpop.xlane.xlu0 %475
    %v477 = vsub.f32 %v469, %v473
    %v478 = vsub.f32 %v470, %v476
    %v479 = vmul.f32 %v477, 1.442695
    %v480 = vpow.pop %v479
    %v481 = vmul.f32 %v478, 1.442695
    %v482 = vpow.pop %v481
    %v483 = vmul.f32 %v480, %v85
    %v484 = vmul.f32 %v482, %v86
    %v485 = vsel %vm154, %v483, 0.0
    %486 = vadd.xlane.f32.xlu0 %v485
    %v487 = vpop.xlane.xlu0 %486
    %v488 = vsel %vm154, %v484, 0.0
    %489 = vadd.xlane.f32.xlu0 %v488
    %v490 = vpop.xlane.xlu0 %489
    %v491 = vmax.f32 %v487, 1.0
    %v492 = vmax.f32 %v490, 1.0
    %v493 = vrcp.pop %v491
    %v494 = vrcp.pop %v492
    %v495 = vmul.f32 %v483, %v493
    %v496 = vmul.f32 %v484, %v494
    %v497 = vpack.c.bf16 %v496, %v495
    %498 = vrot.lane.b32.xlu0 %v125, 40
    %v499 = vpop.permute.xlu0 %498
    %v502 = vsel %vm154, %v497, 0
    %504 = vmatpush.bf16.msra.mxu0 0
    %505 = vmatpush.bf16.msra.mxu0 0
    %506 = vmatpush.bf16.msra.mxu0 0
    %507 = vmatpush.bf16.msra.mxu0 0
    %508 = vmatpush.bf16.msra.mxu0 0
    %509 = vmatpush.bf16.msra.mxu0 0
    %510 = vmatpush.bf16.msra.mxu0 0
    %511 = vmatpush.bf16.msra.mxu0 %v499
    %512 = vmatmul.bf16.gmra.mxu0 %v502
    %v513 = vpop.f32.mrf.mxu0
    %v514 = vadd.f32 0.0, %v513
    %v515 = vpop.f32.mrf.mxu0
    %v516 = vadd.f32 0.0, %v515
    %517 = vdwg.mxu0
    %v518 = vmul.f32 %v514, 0.9
    %v519 = vmul.f32 %v516, 0.9
    %520 = vrot.lane.b32.xlu0 %v204, 40
    %v521 = vpop.permute.xlu0 %520
    %522 = vrot.lane.b32.xlu0 %v205, 40
    %v523 = vpop.permute.xlu0 %522
    %v526 = vadd.f32 %v518, %v521
    %v527 = vadd.f32 %v519, %v523
    %v528 = vpack.c.bf16 %v527, %v526
    %529 = vmatpush.bf16.msra.mxu0 0
    %530 = vmatpush.bf16.msra.mxu0 0
    %531 = vmatpush.bf16.msra.mxu0 0
    %532 = vmatpush.bf16.msra.mxu0 0
    %533 = vmatpush.bf16.msra.mxu0 0
    %534 = vmatpush.bf16.msra.mxu0 0
    %535 = vmatpush.bf16.msra.mxu0 0
    %536 = vmatpush.bf16.msra.mxu0 %v528
    %537 = vmatmul.bf16.gmra.mxu0 %v502
    %v538 = vpop.f32.mrf.mxu0
    %v539 = vadd.f32 0.0, %v538
    %v540 = vpop.f32.mrf.mxu0
    %v541 = vadd.f32 0.0, %v540
    %542 = vdwg.mxu0
    %v543 = vmul.f32 %v539, 0.9
    %v544 = vmul.f32 %v541, 0.9
    %v545 = vadd.f32 %v543, %v521
    %v546 = vadd.f32 %v544, %v523
    %549 = vrot.lane.b32.xlu0 %v337, 8
    %v550 = vpop.permute.xlu0 %549
    %551 = vrot.lane.b32.xlu0 %v338, 8
    %v552 = vpop.permute.xlu0 %551
    %557 = vrot.lane.b32.xlu0 %v441, 16
    %v558 = vpop.permute.xlu0 %557
    %559 = vrot.lane.b32.xlu0 %v442, 16
    %v560 = vpop.permute.xlu0 %559
    %565 = vrot.lane.b32.xlu0 %v545, 24
    %v566 = vpop.permute.xlu0 %565
    %567 = vrot.lane.b32.xlu0 %v546, 24
    %v568 = vpop.permute.xlu0 %567
    %v571 = vsel %vm129, %v233, %v550
    %v572 = vsel %vm129, %v234, %v552
    %v573 = vsel %vm154, %v571, %v558
    %v574 = vsel %vm154, %v572, %v560
    %vm575 = vcmask 195584
    %v576 = vsel %vm575, %v573, %v566
    %v577 = vsel %vm575, %v574, %v568
    %578 = vst.msk [vmem:[#allocation8] sm:$0xff] %vm107, %v576
    %579 = vst.msk [vmem:[#allocation8 + $0x8] sm:$0xff] %vm107, %v577
    // Predicated region
    $region30: #{tpu_custom_call.1} parent=1 // pred_check
      _
    $region31: #{tpu_custom_call.1} parent=1 // pred_check_branch
      %581 = sbr.rel (0) target = $region33
    $region32: #{tpu_custom_call.1} parent=1 // pred_region
      %583 = vsyncadd [#allocation4], 0
      %s584 = sshll.u32 [#allocation8], 4
      %s585 = int_to_ptr.vmem [resolvable:$true] %s584
      %s586 = sshll.u32 %s4, 4
      %s587 = int_to_ptr.hbm [resolvable:$true] %s586
      %592 = dma.vmem_to_hbm [thread:$0]  %s585, 256, %s587, [#allocation4], 128, 128, 8
    $region33: #{tpu_custom_call.1} parent=1 // pred_fallthru
      _
    // Predicated region
    $region34: #{tpu_custom_call.1} parent=1 // pred_check
      _
    $region35: #{tpu_custom_call.1} parent=1 // pred_check_branch
      %594 = sbr.rel (0) target = $region37
    $region36: #{tpu_custom_call.1} parent=1 // pred_region
      %596 = dma.done [#allocation4], 256
    $region37: #{tpu_custom_call.1} parent=1 // pred_fallthru
      _
    %597 = vsyncpa [#allocation3], 1
    %598 = vsyncpa [#allocation6], 1
    %599 = vsyncpa [#allocation4], 1

</llo_original>
